<compile_context>
chip_gen: v7x
topology: tpu7x:2x2x1
jax: 0.10.0
libtpu: 0.0.40
codegen_flags: <defaults>
</compile_context>

<pallas_src>
import functools

import jax
import jax.numpy as jnp
from jax import lax
from jax.experimental import pallas as pl
from jax.experimental.pallas import tpu as pltpu

K = 3  # depthwise kernel size (stride=1, padding=1)


def dsconv_kernel(x_ref, wtap_ref, wpw_ref, vecs_ref, b1_ref, o_ref, xpad_ref,
                  *, H, W, NBH, pad_init_once):
    # x_ref    : (1, NBC, HW) f32    NB batch elements stacked on sublanes
    #                                (NBC = NB*C), flattened H*W on lanes
    # wtap_ref : (9, NBC, HW) f32    per-tap depthwise weights with BN1 scale
    #                                and left/right border masks folded in
    # wpw_ref  : (NBC, NBC)   bf16   block-diagonal pointwise (1x1) weights
    # vecs_ref : (NBC, 4+2*NBH) f32  packed per-sublane constants:
    #                                [bn1 shift | bn2 scale | bn2 shift |
    #                                 SE fc2 bias | fc1 cols | fc2 cols]
    # b1_ref   : (1, NBH)     f32    SE fc1 bias (lane row)
    # o_ref    : (1, NBC, HW) f32
    # xpad_ref : (NBC, HW + 2*LPAD) f32  VMEM scratch (flat, zero halo)
    NBC = x_ref.shape[1]
    HW = H * W
    LPAD = (xpad_ref.shape[1] - HW) // 2      # 128-aligned, >= W + 1

    x = x_ref[0]                                           # (NBC, HW)

    def _zero_halo():
        zpad = jnp.zeros((NBC, LPAD), jnp.float32)
        xpad_ref[:, 0:LPAD] = zpad
        xpad_ref[:, LPAD + HW:LPAD + HW + LPAD] = zpad

    if pad_init_once:
        # Single grid step: the halo is written exactly once per launch.
        @pl.when(pl.program_id(0) == 0)
        def _():
            _zero_halo()
    else:
        # "parallel" batch axis + multi-TensorCore chip => per-core scratch;
        # a program_id==0 guard would be unsafe, so re-zero every step
        # (two aligned vreg-width stores, negligible).
        _zero_halo()

    # Stage the input into the zero-padded flat scratch (aligned store) so
    # every depthwise tap is a statically shifted, lane-dense slice of it.
    xpad_ref[:, LPAD:LPAD + HW] = x

    # Depthwise 3x3 (groups=C, no bias); BN1 scale + border masks are already
    # folded into wtap.  Two independent accumulators halve the serial chain.
    # TODO(synk): if the bundle dump shows vld/XLU binding here, derive the
    #   dx-shifted views from one aligned load per dy row via pltpu.roll.
    acc0 = None
    acc1 = None
    t = 0
    for dy in (-1, 0, 1):
        for dx in (-1, 0, 1):
            start = LPAD + dy * W + dx
            term = xpad_ref[:, start:start + HW] * wtap_ref[t]
            if t % 2 == 0:
                acc0 = term if acc0 is None else acc0 + term
            else:
                acc1 = term if acc1 is None else acc1 + term
            t += 1
    y = acc0 + acc1 + vecs_ref[:, 0:1]                     # + BN1 shift
    y = y * jnp.clip(y + 3.0, 0.0, 6.0) * (1.0 / 6.0)      # hardswish

    # Pointwise 1x1 over all NB batch elements at once: block-diagonal
    # (NBC, NBC) @ (NBC, HW) on the MXU, bf16 operands, f32 accumulation.
    z = jnp.dot(wpw_ref[...], y.astype(jnp.bfloat16),
                preferred_element_type=jnp.float32)        # (NBC, HW) f32
    z = z * vecs_ref[:, 1:2] + vecs_ref[:, 2:3]            # BN2
    z = z * jnp.clip(z + 3.0, 0.0, 6.0) * (1.0 / 6.0)      # hardswish

    # SE entirely on VPU/XLU (no tiny MXU matmuls on the critical path):
    # global pool = lane reduce; fc1 = sublane reduce against block-diagonal
    # weight columns; fc2 = lane reduce.  Everything fits in single vregs.
    pooled = jnp.mean(z, axis=1, keepdims=True)            # (NBC, 1)
    w1cols = vecs_ref[:, 4:4 + NBH]                        # (NBC, NBH)
    w2cols = vecs_ref[:, 4 + NBH:4 + 2 * NBH]              # (NBC, NBH)
    h = jnp.maximum(
        jnp.sum(pooled * w1cols, axis=0, keepdims=True) + b1_ref[...], 0.0)
    s = jax.nn.sigmoid(
        jnp.sum(w2cols * h, axis=1, keepdims=True) + vecs_ref[:, 3:4])

    # SE scale + residual (valid since in_c == out_c, stride == 1): aligned x.
    o_ref[0] = z * s + x


def dsconv_pallas(x_nchw, params):
    """x_nchw: (N, C, H, W) float32. Returns (N, C, H, W) float32."""
    N, C, H, W = x_nchw.shape
    w_pw = params["w_pw"][:, :, 0, 0]                      # (Cout, Cin)
    Cout, Cin = w_pw.shape
    assert Cin == C and Cout == C, "residual path requires in_c == out_c"
    hid = params["w_se1"].shape[0]
    HW = H * W

    # Batch elements per grid step: fill the 8-sublane vreg height (NB=2 for
    # C=4) so VPU ops / stores are not sublane-masked and per-step overhead
    # is amortized.  Falls back to NB=1 when C doesn't divide 8 or N.
    NB = 1
    if C < 8 and 8 % C == 0 and N % (8 // C) == 0:
        NB = 8 // C
    G = N // NB
    NBC = NB * C
    NBH = NB * hid
    LPAD = ((W + 1 + 127) // 128) * 128     # lane-aligned halo, >= W + 1

    # NCHW -> (G, NB*C, H*W): pure metadata reshape (no transpose, no pad).
    x_flat = x_nchw.reshape(G, NBC, HW)

    # ---------- host-side constant folding / packing (tiny, one-time) ------
    col = jnp.arange(HW, dtype=jnp.int32) % W
    mask = {
        -1: (col > 0).astype(jnp.float32),      # kx = -1 taps: no left wrap
        0: jnp.ones((HW,), jnp.float32),
        1: (col < W - 1).astype(jnp.float32),   # kx = +1 taps: no right wrap
    }
    w_dw = params["w_dw"].reshape(C, K * K)
    taps = []
    for dy in (-1, 0, 1):
        for dx in (-1, 0, 1):
            t = (dy + 1) * K + (dx + 1)
            per_c = (w_dw[:, t] * params["bn1_scale"]).reshape(C, 1)   # (C,1)
            taps.append(jnp.tile(per_c, (NB, 1)) * mask[dx][None, :])
    wtap = jnp.stack(taps, axis=0)                              # (9, NBC, HW)

    eye_nb = jnp.eye(NB, dtype=jnp.float32)
    wpw_bd = jnp.kron(eye_nb, w_pw).astype(jnp.bfloat16)        # (NBC, NBC)

    def tile_c(v):                                              # (C,)->(NBC,1)
        return jnp.tile(v.reshape(C, 1), (NB, 1))

    w1 = params["w_se1"][:, :, 0, 0]                            # (hid, C)
    w2 = params["w_se2"][:, :, 0, 0]                            # (C, hid)
    vecs = jnp.concatenate([
        tile_c(params["bn1_shift"]), tile_c(params["bn2_scale"]),
        tile_c(params["bn2_shift"]), tile_c(params["b_se2"]),
        jnp.kron(eye_nb, w1.T),                                 # fc1 columns
        jnp.kron(eye_nb, w2),                                   # fc2 columns
    ], axis=1)                                                  # (NBC, 4+2NBH)
    b1row = jnp.tile(params["b_se1"].reshape(1, hid), (1, NB))  # (1, NBH)

    kernel = functools.partial(dsconv_kernel, H=H, W=W, NBH=NBH,
                               pad_init_once=(G == 1))
    const = lambda shape: pl.BlockSpec(shape, lambda g: tuple(0 for _ in shape))

    out = pl.pallas_call(
        kernel,
        out_shape=jax.ShapeDtypeStruct((G, NBC, HW), jnp.float32),
        grid_spec=pltpu.PrefetchScalarGridSpec(
            num_scalar_prefetch=0,
            grid=(G,),
            in_specs=[
                pl.BlockSpec((1, NBC, HW), lambda g: (g, 0, 0)),
                const((K * K, NBC, HW)),     # folded depthwise tap weights
                const((NBC, NBC)),           # block-diag pointwise (bf16)
                const((NBC, 4 + 2 * NBH)),   # packed per-sublane constants
                const((1, NBH)),             # SE fc1 bias row
            ],
            out_specs=pl.BlockSpec((1, NBC, HW), lambda g: (g, 0, 0)),
            scratch_shapes=[pltpu.VMEM((NBC, HW + 2 * LPAD), jnp.float32)],
        ),
        compiler_params=pltpu.CompilerParams(
            dimension_semantics=("parallel",),
            vmem_limit_bytes=32 * 1024 * 1024),
    )(x_flat, wtap, wpw_bd, vecs, b1row)

    return out.reshape(N, Cout, H, W)


# ------------------------- pure-JAX reference (NCHW) -------------------------
def _hardswish(x):
    return x * jnp.clip(x + 3.0, 0.0, 6.0) / 6.0


def dsconv_reference(x, p, C):
    dn = ("NCHW", "OIHW", "NCHW")
    y = lax.conv_general_dilated(x, p["w_dw"], (1, 1), [(1, 1), (1, 1)],
                                 feature_group_count=C, dimension_numbers=dn)
    y = y * p["bn1_scale"].reshape(1, -1, 1, 1) + p["bn1_shift"].reshape(1, -1, 1, 1)
    y = _hardswish(y)
    y = lax.conv_general_dilated(y, p["w_pw"], (1, 1), [(0, 0), (0, 0)],
                                 dimension_numbers=dn)
    y = y * p["bn2_scale"].reshape(1, -1, 1, 1) + p["bn2_shift"].reshape(1, -1, 1, 1)
    y = _hardswish(y)
    pooled = jnp.mean(y, axis=(2, 3), keepdims=True)
    h = jnp.maximum(
        lax.conv_general_dilated(pooled, p["w_se1"], (1, 1), [(0, 0), (0, 0)],
                                 dimension_numbers=dn)
        + p["b_se1"].reshape(1, -1, 1, 1), 0.0)
    s = jax.nn.sigmoid(
        lax.conv_general_dilated(h, p["w_se2"], (1, 1), [(0, 0), (0, 0)],
                                 dimension_numbers=dn)
        + p["b_se2"].reshape(1, -1, 1, 1))
    y = y * s
    return y + x   # use_residual (in_c == out_c, stride == 1)


# ------------------------------- param setup --------------------------------
def make_params(key, in_c, out_c, se_ratio=0.25, eps=1e-5):
    hid = max(1, int(out_c * se_ratio))
    ks = jax.random.split(key, 12)
    p = {}
    # PyTorch-layout weights
    p["w_dw"] = jax.random.normal(ks[0], (in_c, 1, K, K), jnp.float32) * 0.2
    p["w_pw"] = jax.random.normal(ks[1], (out_c, in_c, 1, 1), jnp.float32) * 0.2
    p["w_se1"] = jax.random.normal(ks[2], (hid, out_c, 1, 1), jnp.float32) * 0.2
    p["b_se1"] = jax.random.normal(ks[3], (hid,), jnp.float32) * 0.1
    p["w_se2"] = jax.random.normal(ks[4], (out_c, hid, 1, 1), jnp.float32) * 0.2
    p["b_se2"] = jax.random.normal(ks[5], (out_c,), jnp.float32) * 0.1
    # BatchNorm (inference semantics), deterministic synthetic running stats
    g1 = 1.0 + 0.1 * jax.random.normal(ks[6], (in_c,), jnp.float32)
    b1 = 0.1 * jax.random.normal(ks[7], (in_c,), jnp.float32)
    m1 = 0.1 * jax.random.normal(ks[8], (in_c,), jnp.float32)
    v1 = jnp.abs(jax.random.normal(ks[9], (in_c,), jnp.float32)) + 0.5
    g2 = 1.0 + 0.1 * jax.random.normal(ks[10], (out_c,), jnp.float32)
    b2 = 0.1 * jax.random.normal(ks[11], (out_c,), jnp.float32)
    m2 = jnp.zeros((out_c,), jnp.float32)
    v2 = jnp.ones((out_c,), jnp.float32)
    p["bn1_scale"] = g1 / jnp.sqrt(v1 + eps)
    p["bn1_shift"] = b1 - m1 * p["bn1_scale"]
    p["bn2_scale"] = g2 / jnp.sqrt(v2 + eps)
    p["bn2_shift"] = b2 - m2 * p["bn2_scale"]
    return p


if __name__ == "__main__":
    N, C, H, W = 2, 4, 16, 16          # in_c == out_c, stride == 1 -> residual
    key = jax.random.PRNGKey(0)
    kx, kp = jax.random.split(key)
    x = jax.random.normal(kx, (N, C, H, W), jnp.float32)

    params = make_params(kp, C, C, se_ratio=0.25)

    out = dsconv_pallas(x, params)
    out = jax.block_until_ready(out)

    ref = dsconv_reference(x, params, C)
    ref = jax.block_until_ready(ref)

    assert out.shape == (N, C, H, W)
    # bf16 MXU operands for the 1x1 conv -> compare at bf16-level tolerance.
    assert jnp.allclose(out, ref, rtol=5e-2, atol=5e-2), (
        "mismatch vs reference: max abs err = "
        f"{float(jnp.max(jnp.abs(out - ref)))}")
    print("KERNEL_OK")
</pallas_src>

<mosaic_0001>
module attributes {stable_mosaic.version = 11 : i64} {
  func.func @dsconv_kernel(%arg0: i32, %arg1: memref<1x8x256xf32, #tpu.memory_space<vmem>>, %arg2: memref<9x8x256xf32, #tpu.memory_space<vmem>>, %arg3: memref<8x8xbf16, #tpu.memory_space<vmem>>, %arg4: memref<8x8xf32, #tpu.memory_space<vmem>>, %arg5: memref<1x2xf32, #tpu.memory_space<vmem>>, %arg6: memref<1x8x256xf32, #tpu.memory_space<vmem>>, %arg7: memref<8x512xf32, #tpu.memory_space<vmem>>) attributes {dimension_semantics = [#tpu.dimension_semantics<parallel>], iteration_bounds = array<i64: 1>, scalar_prefetch = 0 : i64, scratch_operands = 1 : i64, tpu.core_type = #tpu.core_type<tc>, window_params = [{transform_indices = @transform_0, window_bounds = array<i64: 1, 8, 256>}, {pipeline_mode = #tpu.pipeline_mode<synchronous>, transform_indices = @transform_1, window_bounds = array<i64: 9, 8, 256>}, {pipeline_mode = #tpu.pipeline_mode<synchronous>, transform_indices = @transform_2, window_bounds = array<i64: 8, 8>}, {pipeline_mode = #tpu.pipeline_mode<synchronous>, transform_indices = @transform_3, window_bounds = array<i64: 8, 8>}, {pipeline_mode = #tpu.pipeline_mode<synchronous>, transform_indices = @transform_4, window_bounds = array<i64: 1, 2>}, {transform_indices = @transform_5, window_bounds = array<i64: 1, 8, 256>}]} {
    %c0 = arith.constant 0 : index
    %c0_0 = arith.constant 0 : index
    %c0_1 = arith.constant 0 : index
    %0 = vector.load %arg1[%c0, %c0_0, %c0_1] : memref<1x8x256xf32, #tpu.memory_space<vmem>>, vector<1x8x256xf32>
    %1 = vector.shape_cast %0 : vector<1x8x256xf32> to vector<8x256xf32>
    %c0_i32 = arith.constant 0 : i32
    %2 = arith.cmpi eq, %arg0, %c0_i32 : i32
    %3 = arith.extui %2 : i1 to i32
    %c0_i32_2 = arith.constant 0 : i32
    %4 = arith.cmpi ne, %3, %c0_i32_2 : i32
    scf.if %4 {
      %cst_66 = arith.constant 0.000000e+00 : f32
      %111 = vector.broadcast %cst_66 : f32 to vector<8x128xf32>
      %c0_67 = arith.constant 0 : index
      %c0_68 = arith.constant 0 : index
      %112 = vector.load %arg7[%c0_67, %c0_68] : memref<8x512xf32, #tpu.memory_space<vmem>>, vector<8x128xf32>
      tpu.vector_store %arg7[%c0_67, %c0_68], %111 {strides = array<i32>} : memref<8x512xf32, #tpu.memory_space<vmem>>, vector<8x128xf32>,
      %c0_69 = arith.constant 0 : index
      %c384 = arith.constant 384 : index
      %113 = vector.load %arg7[%c0_69, %c384] : memref<8x512xf32, #tpu.memory_space<vmem>>, vector<8x128xf32>
      tpu.vector_store %arg7[%c0_69, %c384], %111 {strides = array<i32>} : memref<8x512xf32, #tpu.memory_space<vmem>>, vector<8x128xf32>,
    } else {
    }
    %c0_3 = arith.constant 0 : index
    %c128 = arith.constant 128 : index
    %5 = vector.load %arg7[%c0_3, %c128] : memref<8x512xf32, #tpu.memory_space<vmem>>, vector<8x256xf32>
    tpu.vector_store %arg7[%c0_3, %c128], %1 {strides = array<i32>} : memref<8x512xf32, #tpu.memory_space<vmem>>, vector<8x256xf32>,
    %c0_4 = arith.constant 0 : index
    %c111 = arith.constant 111 : index
    %6 = vector.load %arg7[%c0_4, %c111] : memref<8x512xf32, #tpu.memory_space<vmem>>, vector<8x256xf32>
    %c0_5 = arith.constant 0 : index
    %c0_6 = arith.constant 0 : index
    %c0_7 = arith.constant 0 : index
    %7 = vector.load %arg2[%c0_5, %c0_6, %c0_7] : memref<9x8x256xf32, #tpu.memory_space<vmem>>, vector<1x8x256xf32>
    %8 = vector.shape_cast %7 : vector<1x8x256xf32> to vector<8x256xf32>
    %9 = arith.mulf %6, %8 : vector<8x256xf32>
    %c0_8 = arith.constant 0 : index
    %c112 = arith.constant 112 : index
    %10 = vector.load %arg7[%c0_8, %c112] : memref<8x512xf32, #tpu.memory_space<vmem>>, vector<8x256xf32>
    %c1 = arith.constant 1 : index
    %c0_9 = arith.constant 0 : index
    %c0_10 = arith.constant 0 : index
    %11 = vector.load %arg2[%c1, %c0_9, %c0_10] : memref<9x8x256xf32, #tpu.memory_space<vmem>>, vector<1x8x256xf32>
    %12 = vector.shape_cast %11 : vector<1x8x256xf32> to vector<8x256xf32>
    %13 = arith.mulf %10, %12 : vector<8x256xf32>
    %c0_11 = arith.constant 0 : index
    %c113 = arith.constant 113 : index
    %14 = vector.load %arg7[%c0_11, %c113] : memref<8x512xf32, #tpu.memory_space<vmem>>, vector<8x256xf32>
    %c2 = arith.constant 2 : index
    %c0_12 = arith.constant 0 : index
    %c0_13 = arith.constant 0 : index
    %15 = vector.load %arg2[%c2, %c0_12, %c0_13] : memref<9x8x256xf32, #tpu.memory_space<vmem>>, vector<1x8x256xf32>
    %16 = vector.shape_cast %15 : vector<1x8x256xf32> to vector<8x256xf32>
    %17 = arith.mulf %14, %16 : vector<8x256xf32>
    %18 = arith.addf %9, %17 : vector<8x256xf32>
    %c0_14 = arith.constant 0 : index
    %c127 = arith.constant 127 : index
    %19 = vector.load %arg7[%c0_14, %c127] : memref<8x512xf32, #tpu.memory_space<vmem>>, vector<8x256xf32>
    %c3 = arith.constant 3 : index
    %c0_15 = arith.constant 0 : index
    %c0_16 = arith.constant 0 : index
    %20 = vector.load %arg2[%c3, %c0_15, %c0_16] : memref<9x8x256xf32, #tpu.memory_space<vmem>>, vector<1x8x256xf32>
    %21 = vector.shape_cast %20 : vector<1x8x256xf32> to vector<8x256xf32>
    %22 = arith.mulf %19, %21 : vector<8x256xf32>
    %23 = arith.addf %13, %22 : vector<8x256xf32>
    %c0_17 = arith.constant 0 : index
    %c128_18 = arith.constant 128 : index
    %24 = vector.load %arg7[%c0_17, %c128_18] : memref<8x512xf32, #tpu.memory_space<vmem>>, vector<8x256xf32>
    %c4 = arith.constant 4 : index
    %c0_19 = arith.constant 0 : index
    %c0_20 = arith.constant 0 : index
    %25 = vector.load %arg2[%c4, %c0_19, %c0_20] : memref<9x8x256xf32, #tpu.memory_space<vmem>>, vector<1x8x256xf32>
    %26 = vector.shape_cast %25 : vector<1x8x256xf32> to vector<8x256xf32>
    %27 = arith.mulf %24, %26 : vector<8x256xf32>
    %28 = arith.addf %18, %27 : vector<8x256xf32>
    %c0_21 = arith.constant 0 : index
    %c129 = arith.constant 129 : index
    %29 = vector.load %arg7[%c0_21, %c129] : memref<8x512xf32, #tpu.memory_space<vmem>>, vector<8x256xf32>
    %c5 = arith.constant 5 : index
    %c0_22 = arith.constant 0 : index
    %c0_23 = arith.constant 0 : index
    %30 = vector.load %arg2[%c5, %c0_22, %c0_23] : memref<9x8x256xf32, #tpu.memory_space<vmem>>, vector<1x8x256xf32>
    %31 = vector.shape_cast %30 : vector<1x8x256xf32> to vector<8x256xf32>
    %32 = arith.mulf %29, %31 : vector<8x256xf32>
    %33 = arith.addf %23, %32 : vector<8x256xf32>
    %c0_24 = arith.constant 0 : index
    %c143 = arith.constant 143 : index
    %34 = vector.load %arg7[%c0_24, %c143] : memref<8x512xf32, #tpu.memory_space<vmem>>, vector<8x256xf32>
    %c6 = arith.constant 6 : index
    %c0_25 = arith.constant 0 : index
    %c0_26 = arith.constant 0 : index
    %35 = vector.load %arg2[%c6, %c0_25, %c0_26] : memref<9x8x256xf32, #tpu.memory_space<vmem>>, vector<1x8x256xf32>
    %36 = vector.shape_cast %35 : vector<1x8x256xf32> to vector<8x256xf32>
    %37 = arith.mulf %34, %36 : vector<8x256xf32>
    %38 = arith.addf %28, %37 : vector<8x256xf32>
    %c0_27 = arith.constant 0 : index
    %c144 = arith.constant 144 : index
    %39 = vector.load %arg7[%c0_27, %c144] : memref<8x512xf32, #tpu.memory_space<vmem>>, vector<8x256xf32>
    %c7 = arith.constant 7 : index
    %c0_28 = arith.constant 0 : index
    %c0_29 = arith.constant 0 : index
    %40 = vector.load %arg2[%c7, %c0_28, %c0_29] : memref<9x8x256xf32, #tpu.memory_space<vmem>>, vector<1x8x256xf32>
    %41 = vector.shape_cast %40 : vector<1x8x256xf32> to vector<8x256xf32>
    %42 = arith.mulf %39, %41 : vector<8x256xf32>
    %43 = arith.addf %33, %42 : vector<8x256xf32>
    %c0_30 = arith.constant 0 : index
    %c145 = arith.constant 145 : index
    %44 = vector.load %arg7[%c0_30, %c145] : memref<8x512xf32, #tpu.memory_space<vmem>>, vector<8x256xf32>
    %c8 = arith.constant 8 : index
    %c0_31 = arith.constant 0 : index
    %c0_32 = arith.constant 0 : index
    %45 = vector.load %arg2[%c8, %c0_31, %c0_32] : memref<9x8x256xf32, #tpu.memory_space<vmem>>, vector<1x8x256xf32>
    %46 = vector.shape_cast %45 : vector<1x8x256xf32> to vector<8x256xf32>
    %47 = arith.mulf %44, %46 : vector<8x256xf32>
    %48 = arith.addf %38, %47 : vector<8x256xf32>
    %49 = arith.addf %48, %43 : vector<8x256xf32>
    %c0_33 = arith.constant 0 : index
    %c0_34 = arith.constant 0 : index
    %50 = vector.load %arg4[%c0_33, %c0_34] : memref<8x8xf32, #tpu.memory_space<vmem>>, vector<8x1xf32>
    %51 = vector.broadcast %50 : vector<8x1xf32> to vector<8x256xf32>
    %52 = arith.addf %49, %51 : vector<8x256xf32>
    %cst = arith.constant 3.000000e+00 : f32
    %53 = vector.broadcast %cst : f32 to vector<8x256xf32>
    %54 = arith.addf %52, %53 : vector<8x256xf32>
    %cst_35 = arith.constant 0.000000e+00 : f32
    %cst_36 = arith.constant 6.000000e+00 : f32
    %55 = vector.broadcast %cst_35 : f32 to vector<8x256xf32>
    %56 = arith.maximumf %55, %54 : vector<8x256xf32>
    %57 = vector.broadcast %cst_36 : f32 to vector<8x256xf32>
    %58 = arith.minimumf %57, %56 : vector<8x256xf32>
    %59 = arith.mulf %52, %58 : vector<8x256xf32>
    %cst_37 = arith.constant 0.166666672 : f32
    %60 = vector.broadcast %cst_37 : f32 to vector<8x256xf32>
    %61 = arith.mulf %59, %60 : vector<8x256xf32>
    %c0_38 = arith.constant 0 : index
    %c0_39 = arith.constant 0 : index
    %62 = vector.load %arg3[%c0_38, %c0_39] : memref<8x8xbf16, #tpu.memory_space<vmem>>, vector<8x8xbf16>
    %63 = arith.truncf %61 : vector<8x256xf32> to vector<8x256xbf16>
    %cst_40 = arith.constant dense<0.000000e+00> : vector<8x256xf32>
    %64 = tpu.matmul %62, %63, %cst_40 {dimension_numbers = #tpu.dot_dimension_numbers<[1], [0], [0], [1], [0, 0, 1, 1], [], []>} : vector<8x8xbf16>, vector<8x256xbf16>, vector<8x256xf32> -> vector<8x256xf32>
    %c0_41 = arith.constant 0 : index
    %c1_42 = arith.constant 1 : index
    %65 = vector.load %arg4[%c0_41, %c1_42] : memref<8x8xf32, #tpu.memory_space<vmem>>, vector<8x1xf32>
    %66 = vector.broadcast %65 : vector<8x1xf32> to vector<8x256xf32>
    %67 = arith.mulf %64, %66 : vector<8x256xf32>
    %c0_43 = arith.constant 0 : index
    %c2_44 = arith.constant 2 : index
    %68 = vector.load %arg4[%c0_43, %c2_44] : memref<8x8xf32, #tpu.memory_space<vmem>>, vector<8x1xf32>
    %69 = vector.broadcast %68 : vector<8x1xf32> to vector<8x256xf32>
    %70 = arith.addf %67, %69 : vector<8x256xf32>
    %cst_45 = arith.constant 3.000000e+00 : f32
    %71 = vector.broadcast %cst_45 : f32 to vector<8x256xf32>
    %72 = arith.addf %70, %71 : vector<8x256xf32>
    %cst_46 = arith.constant 0.000000e+00 : f32
    %cst_47 = arith.constant 6.000000e+00 : f32
    %73 = vector.broadcast %cst_46 : f32 to vector<8x256xf32>
    %74 = arith.maximumf %73, %72 : vector<8x256xf32>
    %75 = vector.broadcast %cst_47 : f32 to vector<8x256xf32>
    %76 = arith.minimumf %75, %74 : vector<8x256xf32>
    %77 = arith.mulf %70, %76 : vector<8x256xf32>
    %cst_48 = arith.constant 0.166666672 : f32
    %78 = vector.broadcast %cst_48 : f32 to vector<8x256xf32>
    %79 = arith.mulf %77, %78 : vector<8x256xf32>
    %cst_49 = arith.constant dense<0.000000e+00> : vector<8xf32>
    %80 = vector.multi_reduction <add>, %79, %cst_49 [1] : vector<8x256xf32> to vector<8xf32>
    %81 = vector.shape_cast %80 : vector<8xf32> to vector<8x1xf32>
    %cst_50 = arith.constant 2.560000e+02 : f32
    %82 = vector.broadcast %cst_50 : f32 to vector<8x1xf32>
    %83 = arith.divf %81, %82 : vector<8x1xf32>
    %c0_51 = arith.constant 0 : index
    %c4_52 = arith.constant 4 : index
    %84 = vector.load %arg4[%c0_51, %c4_52] : memref<8x8xf32, #tpu.memory_space<vmem>>, vector<8x2xf32>
    %c0_53 = arith.constant 0 : index
    %c6_54 = arith.constant 6 : index
    %85 = vector.load %arg4[%c0_53, %c6_54] : memref<8x8xf32, #tpu.memory_space<vmem>>, vector<8x2xf32>
    %86 = vector.broadcast %83 : vector<8x1xf32> to vector<8x2xf32>
    %87 = arith.mulf %86, %84 : vector<8x2xf32>
    %cst_55 = arith.constant dense<0.000000e+00> : vector<2xf32>
    %88 = vector.multi_reduction <add>, %87, %cst_55 [0] : vector<8x2xf32> to vector<2xf32>
    %89 = vector.shape_cast %88 : vector<2xf32> to vector<1x2xf32>
    %c0_56 = arith.constant 0 : index
    %c0_57 = arith.constant 0 : index
    %90 = vector.load %arg5[%c0_56, %c0_57] : memref<1x2xf32, #tpu.memory_space<vmem>>, vector<1x2xf32>
    %91 = arith.addf %89, %90 : vector<1x2xf32>
    %cst_58 = arith.constant 0.000000e+00 : f32
    %92 = vector.broadcast %cst_58 : f32 to vector<1x2xf32>
    %93 = arith.maximumf %91, %92 : vector<1x2xf32>
    %94 = vector.broadcast %93 : vector<1x2xf32> to vector<8x2xf32>
    %95 = arith.mulf %85, %94 : vector<8x2xf32>
    %cst_59 = arith.constant dense<0.000000e+00> : vector<8xf32>
    %96 = vector.multi_reduction <add>, %95, %cst_59 [1] : vector<8x2xf32> to vector<8xf32>
    %97 = vector.shape_cast %96 : vector<8xf32> to vector<8x1xf32>
    %c0_60 = arith.constant 0 : index
    %c3_61 = arith.constant 3 : index
    %98 = vector.load %arg4[%c0_60, %c3_61] : memref<8x8xf32, #tpu.memory_space<vmem>>, vector<8x1xf32>
    %99 = arith.addf %97, %98 : vector<8x1xf32>
    %100 = arith.negf %99 : vector<8x1xf32>
    %101 = math.exp %100 : vector<8x1xf32>
    %cst_62 = arith.constant 1.000000e+00 : f32
    %102 = vector.broadcast %cst_62 : f32 to vector<8x1xf32>
    %103 = arith.addf %102, %101 : vector<8x1xf32>
    %104 = arith.divf %102, %103 : vector<8x1xf32>
    %105 = vector.broadcast %104 : vector<8x1xf32> to vector<8x256xf32>
    %106 = arith.mulf %79, %105 : vector<8x256xf32>
    %107 = arith.addf %106, %1 : vector<8x256xf32>
    %c0_63 = arith.constant 0 : index
    %c0_64 = arith.constant 0 : index
    %c0_65 = arith.constant 0 : index
    %108 = vector.load %arg6[%c0_63, %c0_64, %c0_65] : memref<1x8x256xf32, #tpu.memory_space<vmem>>, vector<1x8x256xf32>
    %109 = vector.shape_cast %108 : vector<1x8x256xf32> to vector<8x256xf32>
    %110 = vector.shape_cast %107 : vector<8x256xf32> to vector<1x8x256xf32>
    tpu.vector_store %arg6[%c0_63, %c0_64, %c0_65], %110 {strides = array<i32>} : memref<1x8x256xf32, #tpu.memory_space<vmem>>, vector<1x8x256xf32>,
    return
  }
  func.func @transform_0(%arg0: i32) -> (i32, i32, i32) {
    %c0_i32 = arith.constant 0 : i32
    %c0_i32_0 = arith.constant 0 : i32
    %c0_i32_1 = arith.constant 0 : i32
    return %arg0, %c0_i32, %c0_i32_0 : i32, i32, i32
  }
  func.func @transform_1(%arg0: i32) -> (i32, i32, i32) {
    %c0_i32 = arith.constant 0 : i32
    %c0_i32_0 = arith.constant 0 : i32
    %c0_i32_1 = arith.constant 0 : i32
    %c0_i32_2 = arith.constant 0 : i32
    return %c0_i32, %c0_i32_0, %c0_i32_1 : i32, i32, i32
  }
  func.func @transform_2(%arg0: i32) -> (i32, i32) {
    %c0_i32 = arith.constant 0 : i32
    %c0_i32_0 = arith.constant 0 : i32
    %c0_i32_1 = arith.constant 0 : i32
    return %c0_i32, %c0_i32_0 : i32, i32
  }
  func.func @transform_3(%arg0: i32) -> (i32, i32) {
    %c0_i32 = arith.constant 0 : i32
    %c0_i32_0 = arith.constant 0 : i32
    %c0_i32_1 = arith.constant 0 : i32
    return %c0_i32, %c0_i32_0 : i32, i32
  }
  func.func @transform_4(%arg0: i32) -> (i32, i32) {
    %c0_i32 = arith.constant 0 : i32
    %c0_i32_0 = arith.constant 0 : i32
    %c0_i32_1 = arith.constant 0 : i32
    return %c0_i32, %c0_i32_0 : i32, i32
  }
  func.func @transform_5(%arg0: i32) -> (i32, i32, i32) {
    %c0_i32 = arith.constant 0 : i32
    %c0_i32_0 = arith.constant 0 : i32
    %c0_i32_1 = arith.constant 0 : i32
    return %arg0, %c0_i32, %c0_i32_0 : i32, i32, i32
  }
}

</mosaic_0001>

<llo_original>
// kernel: tpu_custom_call.1
$region0: #{tpu_custom_call.1}
  #allocation0 [shape = 'u32[]', space=smem, size = 0x4, offset = 0x4, fixed_abs, tag = 'smem constant byte address 0x4 - core index']
  #allocation1 [shape = 'u32[144,128]{1,0:T(1,128)}', space=vmem, size = 0x12000, scoped, tag = 'internal scratch']
  #allocation2 [shape = 'f32[8,512]{1,0:T(8,128)}', space=vmem, size = 0x4000, scoped, tag = 'scratch operand']
  %s0 = inlined_call_operand.hbm [shape: f32[1,8,256], index: 0, kind: input, shape index: {}]
  %s1 = inlined_call_operand.hbm [shape: f32[9,8,256], index: 1, kind: input, shape index: {}]
  %s2 = inlined_call_operand.hbm [shape: bf16[8,8], index: 2, kind: input, shape index: {}]
  %s3 = inlined_call_operand.vmem [shape: f32[8,8], index: 3, kind: input, shape index: {}]
  %s4 = inlined_call_operand.vmem [shape: f32[1,2], index: 4, kind: input, shape index: {}]
  %s5 = inlined_call_operand.hbm [shape: f32[1,8,256], index: 5, kind: output, shape index: {}]
  %s6 = sld [smem:[#allocation0]]
  $region46: #{tpu_custom_call.1} parent=0
    _
  %s8 = ssub.s32 1, %s6
  %s9 = scalar_select 0, %s8, %s6
  $region1: #{tpu_custom_call.1} parent=0
    #allocation3 [shape = 'u8[8192]{0}', space=vmem, size = 0x2000, scoped, tag = 'input window, operand 0, single buffered']
    #allocation4 [shape = 's32[1]{0}', space=sflag, size = 0x4, scoped, tag = 'scoped memory for tpu_custom_call.1']
    #allocation5 [shape = 's32[1]{0}', space=sflag, size = 0x4, scoped, tag = 'scoped memory for tpu_custom_call.1']
    #allocation6 [shape = 'u8[73728]{0}', space=vmem, size = 0x12000, scoped, tag = 'input window, operand 1, single buffered']
    #allocation7 [shape = 's32[1]{0}', space=sflag, size = 0x4, scoped, tag = 'scoped memory for tpu_custom_call.1']
    #allocation8 [shape = 'u8[2048]{0}', space=vmem, size = 0x800, scoped, tag = 'input window, operand 2, single buffered']
    #allocation9 [shape = 'u8[8192]{0}', space=vmem, size = 0x2000, scoped, tag = 'output window, operand 0, single buffered']
    %10 = vsyncpa [#allocation4], 0
    %11 = vsyncpa [#allocation7], 0
    %12 = vsyncpa [#allocation5], 0
    // Predicated region
    $region2: #{tpu_custom_call.1} parent=1 // pred_check
      _
    $region3: #{tpu_custom_call.1} parent=1 // pred_check_branch
      %14 = sbr.rel (0) target = $region5
    $region4: #{tpu_custom_call.1} parent=1 // pred_region
      %s16 = ssub.s32 256, 256
      %17 = vsyncadd [#allocation4], %s16
      %s19 = sshll.u32 [#allocation3], 4
      %s20 = int_to_ptr.vmem [resolvable:$true] %s19
      %22 = dma.hbm_to_vmem [thread:$0]  %s0, 256, %s20, [#allocation4]
    $region5: #{tpu_custom_call.1} parent=1 // pred_fallthru
      _
    // Predicated region
    $region6: #{tpu_custom_call.1} parent=1 // pred_check
      _
    $region7: #{tpu_custom_call.1} parent=1 // pred_check_branch
      %24 = sbr.rel (0) target = $region9
    $region8: #{tpu_custom_call.1} parent=1 // pred_region
      %s26 = ssub.s32 2304, 2304
      %27 = vsyncadd [#allocation7], %s26
      %s28 = sshll.u32 [#allocation6], 4
      %s29 = int_to_ptr.vmem [resolvable:$true] %s28
      %34 = dma.hbm_to_vmem [thread:$0]  %s1, 2304, %s29, [#allocation7], 256, 256, 16
    $region9: #{tpu_custom_call.1} parent=1 // pred_fallthru
      _
    // Predicated region
    $region10: #{tpu_custom_call.1} parent=1 // pred_check
      _
    $region11: #{tpu_custom_call.1} parent=1 // pred_check_branch
      %36 = sbr.rel (0) target = $region13
    $region12: #{tpu_custom_call.1} parent=1 // pred_region
      %s38 = ssub.s32 64, 64
      %39 = vsyncadd [#allocation7], %s38
      %s41 = sshll.u32 [#allocation8], 4
      %s42 = int_to_ptr.vmem [resolvable:$true] %s41
      %44 = dma.hbm_to_vmem [thread:$0]  %s2, 64, %s42, [#allocation7]
    $region13: #{tpu_custom_call.1} parent=1 // pred_fallthru
      _
    // Predicated region
    $region14: #{tpu_custom_call.1} parent=1 // pred_check
      _
    $region15: #{tpu_custom_call.1} parent=1 // pred_check_branch
      %46 = sbr.rel (0) target = $region17
    $region16: #{tpu_custom_call.1} parent=1 // pred_region
      _
    $region17: #{tpu_custom_call.1} parent=1 // pred_fallthru
      _
    // Predicated region
    $region18: #{tpu_custom_call.1} parent=1 // pred_check
      _
    $region19: #{tpu_custom_call.1} parent=1 // pred_check_branch
      %48 = sbr.rel (0) target = $region21
    $region20: #{tpu_custom_call.1} parent=1 // pred_region
      _
    $region21: #{tpu_custom_call.1} parent=1 // pred_fallthru
      _
    // Predicated region
    $region22: #{tpu_custom_call.1} parent=1 // pred_check
      _
    $region23: #{tpu_custom_call.1} parent=1 // pred_check_branch
      %50 = sbr.rel (0) target = $region25
    $region24: #{tpu_custom_call.1} parent=1 // pred_region
      %51 = dma.done [#allocation4], 256
    $region25: #{tpu_custom_call.1} parent=1 // pred_fallthru
      _
    // Predicated region
    $region26: #{tpu_custom_call.1} parent=1 // pred_check
      _
    $region27: #{tpu_custom_call.1} parent=1 // pred_check_branch
      %53 = sbr.rel (0) target = $region29
    $region28: #{tpu_custom_call.1} parent=1 // pred_region
      %54 = dma.done [#allocation7], 2304
    $region29: #{tpu_custom_call.1} parent=1 // pred_fallthru
      _
    // Predicated region
    $region30: #{tpu_custom_call.1} parent=1 // pred_check
      _
    $region31: #{tpu_custom_call.1} parent=1 // pred_check_branch
      %56 = sbr.rel (0) target = $region33
    $region32: #{tpu_custom_call.1} parent=1 // pred_region
      %57 = dma.done [#allocation7], 64
    $region33: #{tpu_custom_call.1} parent=1 // pred_fallthru
      _
    %v59 = vld [vmem:[#allocation3] sm:$0xff]
    %v60 = vld [vmem:[#allocation3 + $0x8] sm:$0xff]
    %p61 = scmp.eq.s32.totalorder 0, 0
    // Predicated region
    $region34: #{tpu_custom_call.1} parent=1 // pred_check
      %p62 = pneg %p61
    $region35: #{tpu_custom_call.1} parent=1 // pred_check_branch
      %64 = sbr.rel (%p62) target = $region37
    $region36: #{tpu_custom_call.1} parent=1 // pred_region
      %65 = vst [vmem:[#allocation2] sm:$0xff] 0.0
      %66 = vst [vmem:[#allocation2 + $0x18] sm:$0xff] 0.0
    $region37: #{tpu_custom_call.1} parent=1 // pred_fallthru
      _
    %67 = vst [vmem:[#allocation2 + $0x8] sm:$0xff] %v59
    %68 = vst [vmem:[#allocation2 + $0x10] sm:$0xff] %v60
    %v69 = vld [vmem:[#allocation2] sm:$0xff]
    %v70 = vld [vmem:[#allocation2 + $0x8] sm:$0xff]
    %v71 = vld [vmem:[#allocation2 + $0x10] sm:$0xff]
    %v72 = vld [vmem:[#allocation6] sm:$0xff]
    %v73 = vld [vmem:[#allocation6 + $0x8] sm:$0xff]
    %76 = vrot.lane.b32.xlu0 %v72, 111
    %v77 = vpop.permute.xlu0 %76
    %78 = vrot.lane.b32.xlu0 %v73, 111
    %v79 = vpop.permute.xlu0 %78
    %vm80 = vcmask 908288
    %v81 = vsel %vm80, %v77, %v79
    %v85 = vmul.f32 %v69, %v77
    %v86 = vmul.f32 %v70, %v81
    %v87 = vmul.f32 %v71, %v79
    %s88 = scalar_lea.vmem [#allocation6], 16
    %v89 = vld [vmem:[%s88] sm:$0xff]
    %v90 = vld [vmem:[%s88 + $0x8] sm:$0xff]
    %93 = vrot.lane.b32.xlu0 %v89, 112
    %v94 = vpop.permute.xlu0 %93
    %95 = vrot.lane.b32.xlu0 %v90, 112
    %v96 = vpop.permute.xlu0 %95
    %vm97 = vcmask 916480
    %v98 = vsel %vm97, %v94, %v96
    %v102 = vmul.f32 %v69, %v94
    %v103 = vmul.f32 %v70, %v98
    %v104 = vmul.f32 %v71, %v96
    %s105 = scalar_lea.vmem [#allocation6], 32
    %v106 = vld [vmem:[%s105] sm:$0xff]
    %v107 = vld [vmem:[%s105 + $0x8] sm:$0xff]
    %110 = vrot.lane.b32.xlu0 %v106, 113
    %v111 = vpop.permute.xlu0 %110
    %112 = vrot.lane.b32.xlu0 %v107, 113
    %v113 = vpop.permute.xlu0 %112
    %vm114 = vcmask 924672
    %v115 = vsel %vm114, %v111, %v113
    %v119 = vmul.f32 %v69, %v111
    %v120 = vmul.f32 %v70, %v115
    %v121 = vmul.f32 %v71, %v113
    %125 = vrot.lane.b32.xlu0 %v119, 126
    %v126 = vpop.permute.xlu0 %125
    %127 = vrot.lane.b32.xlu0 %v120, 126
    %v128 = vpop.permute.xlu0 %127
    %129 = vrot.lane.b32.xlu0 %v121, 126
    %v130 = vpop.permute.xlu0 %129
    %vm131 = vcmask 1031168
    %v132 = vsel %vm131, %v126, %v128
    %v133 = vsel %vm131, %v128, %v130
    %v137 = vadd.f32 %v85, %v132
    %v138 = vadd.f32 %v86, %v133
    %v139 = vadd.f32 %v87, %v130
    %s140 = scalar_lea.vmem [#allocation6], 48
    %v141 = vld [vmem:[%s140] sm:$0xff]
    %v142 = vld [vmem:[%s140 + $0x8] sm:$0xff]
    %145 = vrot.lane.b32.xlu0 %v141, 127
    %v146 = vpop.permute.xlu0 %145
    %147 = vrot.lane.b32.xlu0 %v142, 127
    %v148 = vpop.permute.xlu0 %147
    %vm149 = vcmask 1039360
    %v150 = vsel %vm149, %v146, %v148
    %v154 = vmul.f32 %v69, %v146
    %v155 = vmul.f32 %v70, %v150
    %v156 = vmul.f32 %v71, %v148
    %160 = vrot.lane.b32.xlu0 %v154, 113
    %v161 = vpop.permute.xlu0 %160
    %162 = vrot.lane.b32.xlu0 %v155, 113
    %v163 = vpop.permute.xlu0 %162
    %164 = vrot.lane.b32.xlu0 %v156, 113
    %v165 = vpop.permute.xlu0 %164
    %v166 = vsel %vm114, %v161, %v163
    %v167 = vsel %vm114, %v163, %v165
    %v171 = vadd.f32 %v102, %v166
    %v172 = vadd.f32 %v103, %v167
    %v173 = vadd.f32 %v104, %v165
    %s174 = scalar_lea.vmem [#allocation6], 64
    %v175 = vld [vmem:[%s174] sm:$0xff]
    %v176 = vld [vmem:[%s174 + $0x8] sm:$0xff]
    %v177 = vmul.f32 %v70, %v175
    %v178 = vmul.f32 %v71, %v176
    %181 = vrot.lane.b32.xlu0 %v177, 111
    %v182 = vpop.permute.xlu0 %181
    %183 = vrot.lane.b32.xlu0 %v178, 111
    %v184 = vpop.permute.xlu0 %183
    %v185 = vsel %vm80, %v182, %v184
    %v189 = vadd.f32 %v137, %v182
    %v190 = vadd.f32 %v138, %v185
    %v191 = vadd.f32 %v139, %v184
    %v192 = vld [vmem:[#allocation2 + $0x8] sm:$0xff]
    %v193 = vld [vmem:[#allocation2 + $0x10] sm:$0xff]
    %v194 = vld [vmem:[#allocation2 + $0x18] sm:$0xff]
    %s195 = scalar_lea.vmem [#allocation6], 80
    %v196 = vld [vmem:[%s195] sm:$0xff]
    %v197 = vld [vmem:[%s195 + $0x8] sm:$0xff]
    %200 = vrot.lane.b32.xlu0 %v196, 1
    %v201 = vpop.permute.xlu0 %200
    %202 = vrot.lane.b32.xlu0 %v197, 1
    %v203 = vpop.permute.xlu0 %202
    %vm204 = vcmask 7168
    %v205 = vsel %vm204, %v201, %v203
    %v209 = vmul.f32 %v192, %v201
    %v210 = vmul.f32 %v193, %v205
    %v211 = vmul.f32 %v194, %v203
    %215 = vrot.lane.b32.xlu0 %v209, 111
    %v216 = vpop.permute.xlu0 %215
    %217 = vrot.lane.b32.xlu0 %v210, 111
    %v218 = vpop.permute.xlu0 %217
    %219 = vrot.lane.b32.xlu0 %v211, 111
    %v220 = vpop.permute.xlu0 %219
    %v221 = vsel %vm80, %v216, %v218
    %v222 = vsel %vm80, %v218, %v220
    %v226 = vadd.f32 %v171, %v216
    %v227 = vadd.f32 %v172, %v221
    %v228 = vadd.f32 %v173, %v222
    %s229 = scalar_lea.vmem [#allocation6], 96
    %v230 = vld [vmem:[%s229] sm:$0xff]
    %v231 = vld [vmem:[%s229 + $0x8] sm:$0xff]
    %234 = vrot.lane.b32.xlu0 %v230, 15
    %v235 = vpop.permute.xlu0 %234
    %236 = vrot.lane.b32.xlu0 %v231, 15
    %v237 = vpop.permute.xlu0 %236
    %vm238 = vcmask 121856
    %v239 = vsel %vm238, %v235, %v237
    %v243 = vmul.f32 %v192, %v235
    %v244 = vmul.f32 %v193, %v239
    %v245 = vmul.f32 %v194, %v237
    %249 = vrot.lane.b32.xlu0 %v243, 96
    %v250 = vpop.permute.xlu0 %249
    %251 = vrot.lane.b32.xlu0 %v244, 96
    %v252 = vpop.permute.xlu0 %251
    %253 = vrot.lane.b32.xlu0 %v245, 96
    %v254 = vpop.permute.xlu0 %253
    %vm255 = vcmask 785408
    %v256 = vsel %vm255, %v250, %v252
    %v257 = vsel %vm255, %v252, %v254
    %v261 = vadd.f32 %v189, %v250
    %v262 = vadd.f32 %v190, %v256
    %v263 = vadd.f32 %v191, %v257
    %s264 = scalar_lea.vmem [#allocation6], 112
    %v265 = vld [vmem:[%s264] sm:$0xff]
    %v266 = vld [vmem:[%s264 + $0x8] sm:$0xff]
    %269 = vrot.lane.b32.xlu0 %v265, 16
    %v270 = vpop.permute.xlu0 %269
    %271 = vrot.lane.b32.xlu0 %v266, 16
    %v272 = vpop.permute.xlu0 %271
    %vm273 = vcmask 130048
    %v274 = vsel %vm273, %v270, %v272
    %v278 = vmul.f32 %v192, %v270
    %v279 = vmul.f32 %v193, %v274
    %v280 = vmul.f32 %v194, %v272
    %284 = vrot.lane.b32.xlu0 %v278, 96
    %v285 = vpop.permute.xlu0 %284
    %286 = vrot.lane.b32.xlu0 %v279, 96
    %v287 = vpop.permute.xlu0 %286
    %288 = vrot.lane.b32.xlu0 %v280, 96
    %v289 = vpop.permute.xlu0 %288
    %v290 = vsel %vm255, %v285, %v287
    %v291 = vsel %vm255, %v287, %v289
    %v295 = vadd.f32 %v226, %v285
    %v296 = vadd.f32 %v227, %v290
    %v297 = vadd.f32 %v228, %v291
    %s298 = scalar_lea.vmem [#allocation6], 128
    %v299 = vld [vmem:[%s298] sm:$0xff]
    %v300 = vld [vmem:[%s298 + $0x8] sm:$0xff]
    %303 = vrot.lane.b32.xlu0 %v299, 17
    %v304 = vpop.permute.xlu0 %303
    %305 = vrot.lane.b32.xlu0 %v300, 17
    %v306 = vpop.permute.xlu0 %305
    %vm307 = vcmask 138240
    %v308 = vsel %vm307, %v304, %v306
    %v312 = vmul.f32 %v192, %v304
    %v313 = vmul.f32 %v193, %v308
    %v314 = vmul.f32 %v194, %v306
    %318 = vrot.lane.b32.xlu0 %v312, 94
    %v319 = vpop.permute.xlu0 %318
    %320 = vrot.lane.b32.xlu0 %v313, 94
    %v321 = vpop.permute.xlu0 %320
    %322 = vrot.lane.b32.xlu0 %v314, 94
    %v323 = vpop.permute.xlu0 %322
    %vm324 = vcmask 769024
    %v325 = vsel %vm324, %v319, %v321
    %v326 = vsel %vm324, %v321, %v323
    %v330 = vadd.f32 %v261, %v319
    %v331 = vadd.f32 %v262, %v325
    %v332 = vadd.f32 %v263, %v326
    %336 = vrot.lane.b32.xlu0 %v295, 127
    %v337 = vpop.permute.xlu0 %336
    %338 = vrot.lane.b32.xlu0 %v296, 127
    %v339 = vpop.permute.xlu0 %338
    %340 = vrot.lane.b32.xlu0 %v297, 127
    %v341 = vpop.permute.xlu0 %340
    %v342 = vsel %vm149, %v337, %v339
    %v343 = vsel %vm149, %v339, %v341
    %v347 = vadd.f32 %v330, %v342
    %v348 = vadd.f32 %v331, %v343
    %v349 = vadd.f32 %v332, %v341
    %v350 = vld [vmem:[%s3] sm:$0xff]
    %352 = vset.pattern.permute.xlu0 0
    %353 = vperm.xlu0 %352, %v350
    %v354 = vpop.permute.xlu0 %353
    %v356 = vadd.f32 %v347, %v354
    %v357 = vadd.f32 %v348, %v354
    %v358 = vadd.f32 %v349, %v354
    %v359 = vadd.f32 %v356, 3.0
    %v360 = vadd.f32 %v357, 3.0
    %v361 = vadd.f32 %v358, 3.0
    %v362 = vmax.f32 %v359, 0.0
    %v363 = vmax.f32 %v360, 0.0
    %v364 = vmax.f32 %v361, 0.0
    %v365 = vmin.f32 %v362, 6.0
    %v366 = vmin.f32 %v363, 6.0
    %v367 = vmin.f32 %v364, 6.0
    %v368 = vmul.f32 %v356, %v365
    %v369 = vmul.f32 %v357, %v366
    %v370 = vmul.f32 %v358, %v367
    %v371 = vmul.f32 %v368, 0.16666667
    %v372 = vmul.f32 %v369, 0.16666667
    %v373 = vmul.f32 %v370, 0.16666667
    %v374 = vld [vmem:[#allocation8] sm:$0xf]
    %v375 = vpack.c.bf16 %v371, %v371
    %v376 = vpack.c.bf16 %v372, %v372
    %v377 = vpack.c.bf16 %v373, %v373
    %381 = vrot.lane.b32.xlu0 %v375, 17
    %v382 = vpop.permute.xlu0 %381
    %383 = vrot.lane.b32.xlu0 %v376, 17
    %v384 = vpop.permute.xlu0 %383
    %385 = vrot.lane.b32.xlu0 %v377, 17
    %v386 = vpop.permute.xlu0 %385
    %vm387 = vcmask 138240
    %v388 = vsel %vm387, %v382, %v384
    %v389 = vsel %vm387, %v384, %v386
    %vm390 = vcmask 64512
    %v392 = vsel %vm390, %v374, 0
    %vm394 = vcmask 1043456
    %v396 = vsel %vm394, %v388, 0
    %v399 = vsel %vm394, %v389, 0
    %401 = vmatprep.subr.bf16.mxu0 %v399
    %402 = vmatpush1.bf16.msra.mxu0 %v396
    %403 = vmatprep.subr.bf16.mxu0 0
    %404 = vmatpush1.bf16.msra.mxu0 0
    %405 = vmatprep.subr.bf16.mxu0 0
    %406 = vmatpush1.bf16.msra.mxu0 0
    %407 = vmatprep.subr.bf16.mxu0 0
    %408 = vmatpush1.bf16.msra.mxu0 0
    %409 = vmatprep.subr.bf16.mxu0 0
    %410 = vmatpush1.bf16.msra.mxu0 0
    %411 = vmatprep.subr.bf16.mxu0 0
    %412 = vmatpush1.bf16.msra.mxu0 0
    %413 = vmatprep.subr.bf16.mxu0 0
    %414 = vmatpush1.bf16.msra.mxu0 0
    %415 = vmatprep.subr.bf16.mxu0 0
    %416 = vmatpush1.bf16.msra.mxu0 0
    %417 = vmatprep.subr.bf16.mxu0 0
    %418 = vmatpush1.bf16.msra.mxu0 0
    %419 = vmatprep.subr.bf16.mxu0 0
    %420 = vmatpush1.bf16.msra.mxu0 0
    %421 = vmatprep.subr.bf16.mxu0 0
    %422 = vmatpush1.bf16.msra.mxu0 0
    %423 = vmatprep.subr.bf16.mxu0 0
    %424 = vmatpush1.bf16.msra.mxu0 0
    %425 = vmatprep.subr.bf16.mxu0 0
    %426 = vmatpush1.bf16.msra.mxu0 0
    %427 = vmatprep.subr.bf16.mxu0 0
    %428 = vmatpush1.bf16.msra.mxu0 0
    %429 = vmatprep.subr.bf16.mxu0 0
    %430 = vmatpush1.bf16.msra.mxu0 0
    %431 = vmatprep.subr.bf16.mxu0 0
    %432 = vmatpush1.bf16.msra.mxu0 0
    %433 = vmatprep.mubr.bf16.mxu0 0
    %434 = vmatmul.mubr.bf16.gmra.mrb[0].mxu0 %v392
    %v435 = vpop.f32.mrb[0].mxu0
    %v436 = vadd.f32 0.0, %v435
    %v437 = vpop.f32.mrb[0].mxu0
    %v438 = vadd.f32 0.0, %v437
    %v439 = vpop.f32.mrb[0].mxu0
    %v440 = vpop.f32.mrb[0].mxu0
    %441 = vdwg.mxu0
    %442 = vset.pattern.permute.xlu0 1
    %443 = vperm.xlu0 %442, %v350
    %v444 = vpop.permute.xlu0 %443
    %v446 = vmul.f32 %v436, %v444
    %v447 = vmul.f32 %v438, %v444
    %448 = vset.pattern.permute.xlu0 2
    %449 = vperm.xlu0 %448, %v350
    %v450 = vpop.permute.xlu0 %449
    %v452 = vadd.f32 %v446, %v450
    %v453 = vadd.f32 %v447, %v450
    %v454 = vadd.f32 %v452, 3.0
    %v455 = vadd.f32 %v453, 3.0
    %v456 = vmax.f32 %v454, 0.0
    %v457 = vmax.f32 %v455, 0.0
    %v458 = vmin.f32 %v456, 6.0
    %v459 = vmin.f32 %v457, 6.0
    %v460 = vmul.f32 %v452, %v458
    %v461 = vmul.f32 %v453, %v459
    %v462 = vmul.f32 %v460, 0.16666667
    %v463 = vmul.f32 %v461, 0.16666667
    %v464 = vadd.f32 %v462, %v463
    %465 = vadd.xlane.f32.xlu0 %v464
    %v466 = vpop.xlane.xlu0 %465
    %v467 = vrcp.pop 256.0
    %v468 = vmul.f32 %v466, %v467
    %v469 = vmul.f32 %v468, %v350
    %vm470 = vcmask 48160
    %v471 = vsel %vm470, %v469, 0.0
    %v472 = vrot.slane %v471, 4
    %v473 = vadd.f32 %v471, %v472
    %v474 = vrot.slane %v473, 2
    %v475 = vadd.f32 %v473, %v474
    %v476 = vrot.slane %v475, 1
    %v477 = vadd.f32 %v475, %v476
    %v478 = vld [vmem:[%s4] sm:$0x1]
    %v480 = vlaneseq
    %v481 = vshrl.u32 %v480, 7
    %v482 = vsub.s32 0, %v481
    %v483 = vrot.slane %v478, %v482
    %484 = vrot.lane.b32.xlu0 %v483, 4
    %v485 = vpop.permute.xlu0 %484
    %v487 = vadd.f32 %v477, %v485
    %v488 = vmax.f32 %v487, 0.0
    %v489 = vlaneseq
    %v490 = vshrl.u32 %v489, 7
    %v491 = vsub.s32 0, %v490
    %v492 = vrot.slane %v488, %v491
    %494 = vrot.lane.b32.xlu0 %v492, 2
    %v495 = vpop.permute.xlu0 %494
    %v497 = vmul.f32 %v350, %v495
    %499 = vrot.lane.b32.xlu0 %v497, 122
    %v500 = vpop.permute.xlu0 %499
    %vm502 = vcmask 15360
    %v503 = vsel %vm502, %v500, 0.0
    %504 = vadd.xlane.f32.xlu0 %v503
    %v505 = vpop.xlane.xlu0 %504
    %v506 = vadd.f32 %v505, %v350
    %v507 = vxor.u32 %v506, 2147483648
    %v508 = vmul.f32 %v507, 1.442695
    %v509 = vpow.pop %v508
    %v510 = vadd.f32 %v509, 1.0
    %v511 = vrcp.pop %v510
    %v512 = vmul.f32 1.0, %v511
    %514 = vset.pattern.permute.xlu0 3
    %515 = vperm.xlu0 %514, %v512
    %v516 = vpop.permute.xlu0 %515
    %v518 = vmul.f32 %v462, %v516
    %v519 = vmul.f32 %v463, %v516
    %v520 = vadd.f32 %v518, %v59
    %v521 = vadd.f32 %v519, %v60
    %522 = vst [vmem:[#allocation9] sm:$0xff] %v520
    %523 = vst [vmem:[#allocation9 + $0x8] sm:$0xff] %v521
    // Predicated region
    $region38: #{tpu_custom_call.1} parent=1 // pred_check
      _
    $region39: #{tpu_custom_call.1} parent=1 // pred_check_branch
      %525 = sbr.rel (0) target = $region41
    $region40: #{tpu_custom_call.1} parent=1 // pred_region
      %s527 = ssub.s32 256, 256
      %528 = vsyncadd [#allocation5], %s527
      %s530 = sshll.u32 [#allocation9], 4
      %s531 = int_to_ptr.vmem [resolvable:$true] %s530
      %533 = dma.vmem_to_hbm [thread:$0]  %s531, 256, %s5, [#allocation5]
    $region41: #{tpu_custom_call.1} parent=1 // pred_fallthru
      _
    // Predicated region
    $region42: #{tpu_custom_call.1} parent=1 // pred_check
      _
    $region43: #{tpu_custom_call.1} parent=1 // pred_check_branch
      %535 = sbr.rel (0) target = $region45
    $region44: #{tpu_custom_call.1} parent=1 // pred_region
      %536 = dma.done [#allocation5], 256
    $region45: #{tpu_custom_call.1} parent=1 // pred_fallthru
      _
    %537 = vsyncpa [#allocation4], 1
    %538 = vsyncpa [#allocation7], 1
    %539 = vsyncpa [#allocation5], 1

</llo_original>
